<compile_context>
chip_gen: v7x
topology: tpu7x:2x2x1
jax: 0.10.0
libtpu: 0.0.40
codegen_flags: <defaults>
</compile_context>

<pallas_src>
import jax
import jax.numpy as jnp
from jax.experimental import pallas as pl
from jax.experimental.pallas import tpu as pltpu

MAX_RATING = 6
NUM_THRESH = MAX_RATING - 1       # number of ordinal thresholds (logit columns)
_LANES = 128                      # TPU vreg lane width
_DEFAULT_TILE_ROWS = 256          # 128-sample rows per grid step (= 32K samples/tile,
                                  # ~640 KiB f32 logits tile; fits v5e/v6e/v7x budgets
                                  # with double buffering)


def _ordinal_loss_kernel(logits_ref, labels_ref, out_ref):
    # logits_ref: (K, R, 128)  (threshold, sublane-row, lane) -- lane-dense samples
    # labels_ref: (1, R, 128)  int32 labels; 0 == padding -> contributes exactly 0
    # out_ref:    (1, 1, 128)  per-lane partial sums for this tile (f32, VMEM)
    x = logits_ref[...].astype(jnp.float32)
    lab = labels_ref[...]
    thr = jax.lax.broadcasted_iota(jnp.int32, x.shape, dimension=0)

    mask = (lab > thr).astype(jnp.float32)        # labels > i      (row participates)
    y = (lab > thr + 1).astype(jnp.float32)       # labels > i + 1  (binary target)

    # numerically stable logsigmoid(x) = min(x, 0) - log1p(exp(-|x|))
    logsig = jnp.minimum(x, 0.0) - jnp.log1p(jnp.exp(-jnp.abs(x)))

    # masked BCE-with-logits, simplified:
    #   mask * -(logsig*y + (logsig - x)*(1 - y)) == x*(mask - y) - mask*logsig
    term = x * (mask - y) - mask * logsig

    partial = jnp.sum(term, axis=0, keepdims=True)          # (1, R, 128)  VALU adds
    out_ref[...] = jnp.sum(partial, axis=1, keepdims=True)  # (1, 1, 128)  sublane reduce


def ordinal_regression_loss(logits, labels, *, tile_rows=_DEFAULT_TILE_ROWS):
    """logits: (N, MAX_RATING-1), labels: (N,) int ratings in [1, MAX_RATING] -> scalar."""
    N, K = logits.shape
    assert K == NUM_THRESH

    # --- choose a lane-dense tiling over samples -----------------------------
    rows_needed = pl.cdiv(N, _LANES)                       # number of 128-sample rows
    tile_rows = int(min(tile_rows, pl.cdiv(rows_needed, 8) * 8))
    tile_rows = max(8, (tile_rows // 8) * 8)               # multiple of 8 sublanes
    samples_per_tile = tile_rows * _LANES
    num_tiles = int(pl.cdiv(N, samples_per_tile))
    n_pad = num_tiles * samples_per_tile

    # --- pad + lay out lane-dense: (K, n_rows, 128) / (1, n_rows, 128) -------
    labels_i = labels.astype(jnp.int32)
    pad = n_pad - N
    if pad:
        logits = jnp.pad(logits, ((0, pad), (0, 0)))       # zero logits
        labels_i = jnp.pad(labels_i, ((0, pad),))          # label 0 -> mask all-false
    n_rows = n_pad // _LANES
    logits_t = logits.T.reshape(K, n_rows, _LANES)         # layout plumbing (XLA side)
    labels_t = labels_i.reshape(1, n_rows, _LANES)

    itemsize = jnp.dtype(logits.dtype).itemsize
    cost = pl.CostEstimate(
        flops=10 * n_pad * K,
        transcendentals=2 * n_pad * K,                     # exp + log1p per element
        bytes_accessed=n_pad * K * itemsize + 4 * n_pad + 4 * num_tiles * _LANES,
    )

    partials = pl.pallas_call(
        _ordinal_loss_kernel,
        out_shape=jax.ShapeDtypeStruct((num_tiles, 1, _LANES), jnp.float32),
        grid_spec=pltpu.PrefetchScalarGridSpec(
            num_scalar_prefetch=0,
            grid=(num_tiles,),
            in_specs=[
                pl.BlockSpec((K, tile_rows, _LANES), lambda i: (0, i, 0)),
                pl.BlockSpec((1, tile_rows, _LANES), lambda i: (0, i, 0)),
            ],
            out_specs=pl.BlockSpec((1, 1, _LANES), lambda i: (i, 0, 0)),
        ),
        compiler_params=pltpu.CompilerParams(
            dimension_semantics=("parallel",),             # independent tiles (v7x 2 TCs)
        ),
        cost_estimate=cost,
    )(logits_t, labels_t)

    # tiny final reduction + scale done once, outside the hot loop
    return jnp.sum(partials) * (1.0 / MAX_RATING)


if __name__ == "__main__":
    key = jax.random.PRNGKey(0)
    k1, k2 = jax.random.split(key)

    N = 16  # small batch of samples
    logits = jax.random.normal(k1, (N, NUM_THRESH), dtype=jnp.float32)
    labels = jax.random.randint(k2, (N,), 1, MAX_RATING + 1, dtype=jnp.int32)

    loss = ordinal_regression_loss(logits, labels)
    loss = jax.block_until_ready(loss)

    # pure-JAX reference (same math as the PyTorch module, dense-masked form)
    col = jnp.arange(NUM_THRESH)[None, :]
    lab = labels[:, None]
    mask = (lab > col).astype(jnp.float32)
    y = (lab > col + 1).astype(jnp.float32)
    logsig = jax.nn.log_sigmoid(logits)
    ref = jnp.sum(mask * -(logsig * y + (logsig - logits) * (1.0 - y))) / MAX_RATING

    assert jnp.allclose(loss, ref, rtol=1e-5, atol=1e-5), (loss, ref)
    print("KERNEL_OK")
</pallas_src>

<mosaic_0001>
module attributes {stable_mosaic.version = 11 : i64} {
  func.func @_ordinal_loss_kernel(%arg0: i32, %arg1: memref<5x8x128xf32, #tpu.memory_space<vmem>>, %arg2: memref<1x8x128xi32, #tpu.memory_space<vmem>>, %arg3: memref<1x1x128xf32, #tpu.memory_space<vmem>>) attributes {dimension_semantics = [#tpu.dimension_semantics<parallel>], iteration_bounds = array<i64: 1>, scalar_prefetch = 0 : i64, scratch_operands = 0 : i64, tpu.core_type = #tpu.core_type<tc>, window_params = [{transform_indices = @transform_0, window_bounds = array<i64: 5, 8, 128>}, {transform_indices = @transform_1, window_bounds = array<i64: 1, 8, 128>}, {transform_indices = @transform_2, window_bounds = array<i64: 1, 1, 128>}]} {
    %c0 = arith.constant 0 : index
    %c0_0 = arith.constant 0 : index
    %c0_1 = arith.constant 0 : index
    %0 = vector.load %arg1[%c0, %c0_0, %c0_1] : memref<5x8x128xf32, #tpu.memory_space<vmem>>, vector<5x8x128xf32>
    %c0_2 = arith.constant 0 : index
    %c0_3 = arith.constant 0 : index
    %c0_4 = arith.constant 0 : index
    %1 = vector.load %arg2[%c0_2, %c0_3, %c0_4] : memref<1x8x128xi32, #tpu.memory_space<vmem>>, vector<1x8x128xi32>
    %2 = tpu.iota {dimensions = array<i32: 0>} : vector<5x8x128xi32>
    %3 = vector.broadcast %1 : vector<1x8x128xi32> to vector<5x8x128xi32>
    %4 = arith.cmpi sgt, %3, %2 : vector<5x8x128xi32>
    %5 = arith.extui %4 : vector<5x8x128xi1> to vector<5x8x128xi32>
    %6 = arith.sitofp %5 : vector<5x8x128xi32> to vector<5x8x128xf32>
    %c1_i32 = arith.constant 1 : i32
    %7 = vector.broadcast %c1_i32 : i32 to vector<5x8x128xi32>
    %8 = arith.addi %2, %7 : vector<5x8x128xi32>
    %9 = vector.broadcast %1 : vector<1x8x128xi32> to vector<5x8x128xi32>
    %10 = arith.cmpi sgt, %9, %8 : vector<5x8x128xi32>
    %11 = arith.extui %10 : vector<5x8x128xi1> to vector<5x8x128xi32>
    %12 = arith.sitofp %11 : vector<5x8x128xi32> to vector<5x8x128xf32>
    %cst = arith.constant 0.000000e+00 : f32
    %13 = vector.broadcast %cst : f32 to vector<5x8x128xf32>
    %14 = arith.minimumf %0, %13 : vector<5x8x128xf32>
    %15 = math.absf %0 : vector<5x8x128xf32>
    %cst_5 = arith.constant 0.000000e+00 : f32
    %16 = vector.broadcast %cst_5 : f32 to vector<5x8x128xf32>
    %17 = arith.subf %16, %15 : vector<5x8x128xf32>
    %18 = math.exp %17 : vector<5x8x128xf32>
    %19 = math.log1p %18 : vector<5x8x128xf32>
    %20 = arith.subf %14, %19 : vector<5x8x128xf32>
    %21 = arith.subf %6, %12 : vector<5x8x128xf32>
    %22 = arith.mulf %0, %21 : vector<5x8x128xf32>
    %23 = arith.mulf %6, %20 : vector<5x8x128xf32>
    %24 = arith.subf %22, %23 : vector<5x8x128xf32>
    %cst_6 = arith.constant dense<0.000000e+00> : vector<8x128xf32>
    %25 = vector.multi_reduction <add>, %24, %cst_6 [0] : vector<5x8x128xf32> to vector<8x128xf32>
    %26 = vector.shape_cast %25 : vector<8x128xf32> to vector<1x8x128xf32>
    %cst_7 = arith.constant dense<0.000000e+00> : vector<1x128xf32>
    %27 = vector.multi_reduction <add>, %26, %cst_7 [1] : vector<1x8x128xf32> to vector<1x128xf32>
    %28 = vector.shape_cast %27 : vector<1x128xf32> to vector<1x1x128xf32>
    %c0_8 = arith.constant 0 : index
    %c0_9 = arith.constant 0 : index
    %c0_10 = arith.constant 0 : index
    %29 = vector.load %arg3[%c0_8, %c0_9, %c0_10] : memref<1x1x128xf32, #tpu.memory_space<vmem>>, vector<1x1x128xf32>
    tpu.vector_store %arg3[%c0_8, %c0_9, %c0_10], %28 {strides = array<i32>} : memref<1x1x128xf32, #tpu.memory_space<vmem>>, vector<1x1x128xf32>,
    return
  }
  func.func @transform_0(%arg0: i32) -> (i32, i32, i32) {
    %c0_i32 = arith.constant 0 : i32
    %c0_i32_0 = arith.constant 0 : i32
    %c0_i32_1 = arith.constant 0 : i32
    return %c0_i32, %arg0, %c0_i32_0 : i32, i32, i32
  }
  func.func @transform_1(%arg0: i32) -> (i32, i32, i32) {
    %c0_i32 = arith.constant 0 : i32
    %c0_i32_0 = arith.constant 0 : i32
    %c0_i32_1 = arith.constant 0 : i32
    return %c0_i32, %arg0, %c0_i32_0 : i32, i32, i32
  }
  func.func @transform_2(%arg0: i32) -> (i32, i32, i32) {
    %c0_i32 = arith.constant 0 : i32
    %c0_i32_0 = arith.constant 0 : i32
    %c0_i32_1 = arith.constant 0 : i32
    return %arg0, %c0_i32, %c0_i32_0 : i32, i32, i32
  }
}

</mosaic_0001>

<llo_original>
// kernel: tpu_custom_call.1
$region0: #{tpu_custom_call.1}
  #allocation0 [shape = 'u32[]', space=smem, size = 0x4, offset = 0x4, fixed_abs, tag = 'smem constant byte address 0x4 - core index']
  #allocation1 [shape = 'u32[144,128]{1,0:T(1,128)}', space=vmem, size = 0x12000, scoped, tag = 'internal scratch']
  %s0 = inlined_call_operand.hbm [shape: f32[5,8,128], index: 0, kind: input, shape index: {}]
  %s1 = inlined_call_operand.hbm [shape: s32[1,8,128], index: 1, kind: input, shape index: {}]
  %s2 = inlined_call_operand.hbm [shape: f32[1,1,128], index: 2, kind: output, shape index: {}]
  %s3 = sld [smem:[#allocation0]]
  $region26: #{tpu_custom_call.1} parent=0
    _
  %s5 = ssub.s32 1, %s3
  %s6 = scalar_select 0, %s5, %s3
  $region1: #{tpu_custom_call.1} parent=0
    #allocation2 [shape = 'u8[20480]{0}', space=vmem, size = 0x5000, scoped, tag = 'input window, operand 0, single buffered']
    #allocation3 [shape = 's32[1]{0}', space=sflag, size = 0x4, scoped, tag = 'scoped memory for tpu_custom_call.1']
    #allocation4 [shape = 's32[1]{0}', space=sflag, size = 0x4, scoped, tag = 'scoped memory for tpu_custom_call.1']
    #allocation5 [shape = 'u8[4096]{0}', space=vmem, size = 0x1000, scoped, tag = 'input window, operand 1, single buffered']
    #allocation6 [shape = 's32[1]{0}', space=sflag, size = 0x4, scoped, tag = 'scoped memory for tpu_custom_call.1']
    #allocation7 [shape = 'u8[512]{0}', space=vmem, size = 0x400, scoped, tag = 'output window, operand 0, single buffered']
    %7 = vsyncpa [#allocation3], 0
    %8 = vsyncpa [#allocation6], 0
    %9 = vsyncpa [#allocation4], 0
    // Predicated region
    $region2: #{tpu_custom_call.1} parent=1 // pred_check
      _
    $region3: #{tpu_custom_call.1} parent=1 // pred_check_branch
      %11 = sbr.rel (0) target = $region5
    $region4: #{tpu_custom_call.1} parent=1 // pred_region
      %s13 = ssub.s32 640, 640
      %14 = vsyncadd [#allocation3], %s13
      %s15 = sshll.u32 [#allocation2], 4
      %s16 = int_to_ptr.vmem [resolvable:$true] %s15
      %21 = dma.hbm_to_vmem [thread:$0]  %s0, 640, %s16, [#allocation3], 128, 128, 8
    $region5: #{tpu_custom_call.1} parent=1 // pred_fallthru
      _
    // Predicated region
    $region6: #{tpu_custom_call.1} parent=1 // pred_check
      _
    $region7: #{tpu_custom_call.1} parent=1 // pred_check_branch
      %23 = sbr.rel (0) target = $region9
    $region8: #{tpu_custom_call.1} parent=1 // pred_region
      %s25 = ssub.s32 128, 128
      %26 = vsyncadd [#allocation6], %s25
      %s28 = sshll.u32 [#allocation5], 4
      %s29 = int_to_ptr.vmem [resolvable:$true] %s28
      %31 = dma.hbm_to_vmem [thread:$0]  %s1, 128, %s29, [#allocation6]
    $region9: #{tpu_custom_call.1} parent=1 // pred_fallthru
      _
    // Predicated region
    $region10: #{tpu_custom_call.1} parent=1 // pred_check
      _
    $region11: #{tpu_custom_call.1} parent=1 // pred_check_branch
      %33 = sbr.rel (0) target = $region13
    $region12: #{tpu_custom_call.1} parent=1 // pred_region
      %34 = dma.done [#allocation3], 640
    $region13: #{tpu_custom_call.1} parent=1 // pred_fallthru
      _
    // Predicated region
    $region14: #{tpu_custom_call.1} parent=1 // pred_check
      _
    $region15: #{tpu_custom_call.1} parent=1 // pred_check_branch
      %36 = sbr.rel (0) target = $region17
    $region16: #{tpu_custom_call.1} parent=1 // pred_region
      %37 = dma.done [#allocation6], 128
    $region17: #{tpu_custom_call.1} parent=1 // pred_fallthru
      _
    %v38 = vld [vmem:[#allocation2] sm:$0xff]
    %v39 = vld [vmem:[#allocation2 + $0x8] sm:$0xff]
    %v40 = vld [vmem:[#allocation2 + $0x10] sm:$0xff]
    %v41 = vld [vmem:[#allocation2 + $0x18] sm:$0xff]
    %v42 = vld [vmem:[#allocation2 + $0x20] sm:$0xff]
    %v43 = vld [vmem:[#allocation5] sm:$0xff]
    %vm44 = vcmp.gt.s32.totalorder %v43, 0
    %vm45 = vcmp.gt.s32.totalorder %v43, 1
    %vm46 = vcmp.gt.s32.totalorder %v43, 2
    %vm47 = vcmp.gt.s32.totalorder %v43, 3
    %vm48 = vcmp.gt.s32.totalorder %v43, 4
    %v49 = vsel %vm44, 1, 0
    %v50 = vsel %vm45, 1, 0
    %v51 = vsel %vm46, 1, 0
    %v52 = vsel %vm47, 1, 0
    %v53 = vsel %vm48, 1, 0
    %v54 = vcvt.s32.f32 %v49
    %v55 = vcvt.s32.f32 %v50
    %v56 = vcvt.s32.f32 %v51
    %v57 = vcvt.s32.f32 %v52
    %v58 = vcvt.s32.f32 %v53
    %vm59 = vcmp.gt.s32.totalorder %v43, 5
    %v60 = vsel %vm59, 1, 0
    %v61 = vcvt.s32.f32 %v60
    %v62 = vmin.f32 %v38, 0.0
    %v63 = vmin.f32 %v39, 0.0
    %v64 = vmin.f32 %v40, 0.0
    %v65 = vmin.f32 %v41, 0.0
    %v66 = vmin.f32 %v42, 0.0
    %v67 = vand.u32 2147483647, %v38
    %v68 = vand.u32 2147483647, %v39
    %v69 = vand.u32 2147483647, %v40
    %v70 = vand.u32 2147483647, %v41
    %v71 = vand.u32 2147483647, %v42
    %v72 = vsub.f32 0.0, %v67
    %v73 = vsub.f32 0.0, %v68
    %v74 = vsub.f32 0.0, %v69
    %v75 = vsub.f32 0.0, %v70
    %v76 = vsub.f32 0.0, %v71
    %v77 = vmul.f32 %v72, 1.442695
    %v78 = vpow.pop %v77
    %v79 = vmul.f32 %v73, 1.442695
    %v80 = vpow.pop %v79
    %v81 = vmul.f32 %v74, 1.442695
    %v82 = vpow.pop %v81
    %v83 = vmul.f32 %v75, 1.442695
    %v84 = vpow.pop %v83
    %v85 = vmul.f32 %v76, 1.442695
    %v86 = vpow.pop %v85
    %v87 = vadd.f32 %v78, 1.0
    %v88 = vlog2.pop %v87
    %v89 = vmul.f32 %v88, 0.6931472
    %v90 = vmul.f32 -0.5, %v78
    %v91 = vadd.f32 %v90, 1.0
    %v92 = vmul.f32 %v91, %v78
    %v93 = vand.u32 2147483647, %v78
    %vm94 = vcmp.lt.f32.partialorder %v93, 0.0004427343
    %v95 = vsel %vm94, %v92, %v89
    %v96 = vadd.f32 %v80, 1.0
    %v97 = vlog2.pop %v96
    %v98 = vmul.f32 %v97, 0.6931472
    %v99 = vmul.f32 -0.5, %v80
    %v100 = vadd.f32 %v99, 1.0
    %v101 = vmul.f32 %v100, %v80
    %v102 = vand.u32 2147483647, %v80
    %vm103 = vcmp.lt.f32.partialorder %v102, 0.0004427343
    %v104 = vsel %vm103, %v101, %v98
    %v105 = vadd.f32 %v82, 1.0
    %v106 = vlog2.pop %v105
    %v107 = vmul.f32 %v106, 0.6931472
    %v108 = vmul.f32 -0.5, %v82
    %v109 = vadd.f32 %v108, 1.0
    %v110 = vmul.f32 %v109, %v82
    %v111 = vand.u32 2147483647, %v82
    %vm112 = vcmp.lt.f32.partialorder %v111, 0.0004427343
    %v113 = vsel %vm112, %v110, %v107
    %v114 = vadd.f32 %v84, 1.0
    %v115 = vlog2.pop %v114
    %v116 = vmul.f32 %v115, 0.6931472
    %v117 = vmul.f32 -0.5, %v84
    %v118 = vadd.f32 %v117, 1.0
    %v119 = vmul.f32 %v118, %v84
    %v120 = vand.u32 2147483647, %v84
    %vm121 = vcmp.lt.f32.partialorder %v120, 0.0004427343
    %v122 = vsel %vm121, %v119, %v116
    %v123 = vadd.f32 %v86, 1.0
    %v124 = vlog2.pop %v123
    %v125 = vmul.f32 %v124, 0.6931472
    %v126 = vmul.f32 -0.5, %v86
    %v127 = vadd.f32 %v126, 1.0
    %v128 = vmul.f32 %v127, %v86
    %v129 = vand.u32 2147483647, %v86
    %vm130 = vcmp.lt.f32.partialorder %v129, 0.0004427343
    %v131 = vsel %vm130, %v128, %v125
    %v132 = vsub.f32 %v62, %v95
    %v133 = vsub.f32 %v63, %v104
    %v134 = vsub.f32 %v64, %v113
    %v135 = vsub.f32 %v65, %v122
    %v136 = vsub.f32 %v66, %v131
    %v137 = vsub.f32 %v54, %v55
    %v138 = vsub.f32 %v55, %v56
    %v139 = vsub.f32 %v56, %v57
    %v140 = vsub.f32 %v57, %v58
    %v141 = vsub.f32 %v58, %v61
    %v142 = vmul.f32 %v38, %v137
    %v143 = vmul.f32 %v39, %v138
    %v144 = vmul.f32 %v40, %v139
    %v145 = vmul.f32 %v41, %v140
    %v146 = vmul.f32 %v42, %v141
    %v147 = vmul.f32 %v54, %v132
    %v148 = vmul.f32 %v55, %v133
    %v149 = vmul.f32 %v56, %v134
    %v150 = vmul.f32 %v57, %v135
    %v151 = vmul.f32 %v58, %v136
    %v152 = vsub.f32 %v142, %v147
    %v153 = vsub.f32 %v143, %v148
    %v154 = vsub.f32 %v144, %v149
    %v155 = vsub.f32 %v145, %v150
    %v156 = vsub.f32 %v146, %v151
    %v157 = vadd.f32 %v152, %v153
    %v158 = vadd.f32 %v157, %v154
    %v159 = vadd.f32 %v158, %v155
    %v160 = vadd.f32 %v159, %v156
    %v161 = vrot.slane %v160, 4
    %v162 = vadd.f32 %v160, %v161
    %v163 = vrot.slane %v162, 2
    %v164 = vadd.f32 %v162, %v163
    %v165 = vrot.slane %v164, 1
    %v166 = vadd.f32 %v164, %v165
    %167 = vst [vmem:[#allocation7] sm:$0x1] %v166
    // Predicated region
    $region18: #{tpu_custom_call.1} parent=1 // pred_check
      _
    $region19: #{tpu_custom_call.1} parent=1 // pred_check_branch
      %169 = sbr.rel (0) target = $region21
    $region20: #{tpu_custom_call.1} parent=1 // pred_region
      %s171 = ssub.s32 16, 16
      %172 = vsyncadd [#allocation4], %s171
      %s174 = sshll.u32 [#allocation7], 4
      %s175 = int_to_ptr.vmem [resolvable:$true] %s174
      %177 = dma.vmem_to_hbm [thread:$0]  %s175, 16, %s2, [#allocation4]
    $region21: #{tpu_custom_call.1} parent=1 // pred_fallthru
      _
    // Predicated region
    $region22: #{tpu_custom_call.1} parent=1 // pred_check
      _
    $region23: #{tpu_custom_call.1} parent=1 // pred_check_branch
      %179 = sbr.rel (0) target = $region25
    $region24: #{tpu_custom_call.1} parent=1 // pred_region
      %180 = dma.done [#allocation4], 16
    $region25: #{tpu_custom_call.1} parent=1 // pred_fallthru
      _
    %181 = vsyncpa [#allocation3], 1
    %182 = vsyncpa [#allocation6], 1
    %183 = vsyncpa [#allocation4], 1

</llo_original>
